<compile_context>
chip_gen: v7x
topology: tpu7x:2x2x1
jax: 0.10.0
libtpu: 0.0.40
codegen_flags: <defaults>
</compile_context>

<pallas_src>
import functools

import jax
import jax.numpy as jnp
from jax.experimental import pallas as pl
from jax.experimental.pallas import tpu as pltpu


# Output lane layout of the (1, 128) result row.
_L_GRAPHEME_LOSS = 0
_L_GRAPHEME_ACC = 1
_L_VOWEL_LOSS = 2
_L_VOWEL_ACC = 3
_L_CONSONANT_LOSS = 4
_L_CONSONANT_ACC = 5
_L_TOTAL_LOSS = 6
_L_TOTAL_ACC = 7


def _fused_eval_kernel(total_b, needs_mask,
                       g_ref, v_ref, c_ref, lab_ref, out_ref):
    """Fused CE + accuracy for the three heads of one batch tile.

    g_ref  : (TB, 168) logits (any float dtype) in VMEM
    v_ref  : (TB, 11)
    c_ref  : (TB, 7)
    lab_ref: (TB, 3) int32 labels
    out_ref: (1, 128) f32 -- resident accumulator across the batch grid axis.
    """
    i = pl.program_id(0)
    tb = g_ref.shape[0]

    @pl.when(i == 0)
    def _init():
        out_ref[...] = jnp.zeros_like(out_ref)

    labels = lab_ref[...]                                   # (TB, 3) int32

    if needs_mask:
        row_ids = i * tb + jax.lax.broadcasted_iota(jnp.int32, (tb, 1), 0)
        valid = row_ids < total_b                            # (TB, 1) bool
    else:
        valid = None

    def head_sums(logits, lab_col):
        """Per-tile sums of CE loss and correct-prediction count for one head."""
        logits = logits.astype(jnp.float32)                  # (TB, C)
        c = logits.shape[1]
        col = jax.lax.broadcasted_iota(jnp.int32, logits.shape, 1)

        # cross entropy: logsumexp - picked logit
        row_max = jnp.max(logits, axis=-1, keepdims=True)                 # (TB,1)
        lse = row_max + jnp.log(
            jnp.sum(jnp.exp(logits - row_max), axis=-1, keepdims=True))   # (TB,1)
        onehot = col == lab_col                                           # (TB,C)
        picked = jnp.sum(jnp.where(onehot, logits, 0.0), axis=-1,
                         keepdims=True)                                   # (TB,1)
        per_loss = lse - picked                                           # (TB,1)

        # accuracy: argmax with first-index tie-break (matches torch/jnp)
        is_max = logits == row_max
        pred = jnp.min(jnp.where(is_max, col, c), axis=-1, keepdims=True)  # (TB,1)
        correct = (pred == lab_col).astype(jnp.float32)                    # (TB,1)

        if valid is not None:
            per_loss = jnp.where(valid, per_loss, 0.0)
            correct = jnp.where(valid, correct, 0.0)

        return (jnp.sum(per_loss, axis=0, keepdims=True),    # (1,1)
                jnp.sum(correct, axis=0, keepdims=True))     # (1,1)

    gl, ga = head_sums(g_ref[...], labels[:, 0:1])
    vl, va = head_sums(v_ref[...], labels[:, 1:2])
    cl, ca = head_sums(c_ref[...], labels[:, 2:3])

    # Pack the six per-head sums + combined sums into one lane-dense row and
    # accumulate into the resident output block.
    lane = jax.lax.broadcasted_iota(jnp.int32, (1, 128), 1)
    delta = jnp.zeros((1, 128), jnp.float32)
    delta = jnp.where(lane == _L_GRAPHEME_LOSS, gl, delta)
    delta = jnp.where(lane == _L_GRAPHEME_ACC, ga, delta)
    delta = jnp.where(lane == _L_VOWEL_LOSS, vl, delta)
    delta = jnp.where(lane == _L_VOWEL_ACC, va, delta)
    delta = jnp.where(lane == _L_CONSONANT_LOSS, cl, delta)
    delta = jnp.where(lane == _L_CONSONANT_ACC, ca, delta)
    delta = jnp.where(lane == _L_TOTAL_LOSS, gl + vl + cl, delta)
    delta = jnp.where(lane == _L_TOTAL_ACC, ga + va + ca, delta)
    out_ref[...] += delta

    @pl.when(i == pl.num_programs(0) - 1)
    def _finalize():
        # mean over the TRUE batch size; combined acc additionally / 3.
        scale = jnp.where(lane == _L_TOTAL_ACC,
                          1.0 / (3.0 * total_b), 1.0 / total_b)
        out_ref[...] = out_ref[...] * scale


@functools.partial(jax.jit, static_argnames=("block_rows",))
def multi_heads_evaluation_forward(grapheme_logits, vowel_logits,
                                   consonant_logits, labels, *,
                                   block_rows=1024):
    """Pallas equivalent of MultiHeadsEvaluation.forward (no mixup, no JS-div)."""
    b = grapheme_logits.shape[0]
    n_g = grapheme_logits.shape[1]
    n_v = vowel_logits.shape[1]
    n_c = consonant_logits.shape[1]
    labels = labels.astype(jnp.int32)

    # Batch tile: full batch if it fits, otherwise sublane-aligned tiles.
    if b <= block_rows:
        tb = b                              # equals full dim -> always legal
    else:
        tb = max(8, (block_rows // 8) * 8)  # multiple of 8 for (8,128) rule
    grid = (pl.cdiv(b, tb),)
    needs_mask = (b % tb) != 0

    kernel = functools.partial(_fused_eval_kernel, b, needs_mask)

    out = pl.pallas_call(
        kernel,
        out_shape=jax.ShapeDtypeStruct((1, 128), jnp.float32),
        grid_spec=pltpu.PrefetchScalarGridSpec(
            num_scalar_prefetch=0,
            grid=grid,
            in_specs=[
                pl.BlockSpec((tb, n_g), lambda i: (i, 0)),
                pl.BlockSpec((tb, n_v), lambda i: (i, 0)),
                pl.BlockSpec((tb, n_c), lambda i: (i, 0)),
                pl.BlockSpec((tb, 3), lambda i: (i, 0)),
            ],
            out_specs=pl.BlockSpec((1, 128), lambda i: (0, 0)),
        ),
        compiler_params=pltpu.CompilerParams(
            dimension_semantics=("arbitrary",)),   # batch axis is a reduction
    )(grapheme_logits, vowel_logits, consonant_logits, labels)

    s = out[0]
    return {
        'grapheme_loss': s[_L_GRAPHEME_LOSS], 'grapheme_acc': s[_L_GRAPHEME_ACC],
        'vowel_loss': s[_L_VOWEL_LOSS], 'vowel_acc': s[_L_VOWEL_ACC],
        'consonant_loss': s[_L_CONSONANT_LOSS], 'consonant_acc': s[_L_CONSONANT_ACC],
        'loss': s[_L_TOTAL_LOSS], 'acc': s[_L_TOTAL_ACC],
    }


def _reference_forward(grapheme_logits, vowel_logits, consonant_logits, labels):
    """Pure-JAX reference for sanity checking."""
    def ce_acc(logits, lab):
        logits = logits.astype(jnp.float32)
        lse = jax.nn.logsumexp(logits, axis=-1)
        picked = jnp.take_along_axis(logits, lab[:, None], axis=-1)[:, 0]
        loss = jnp.mean(lse - picked)
        acc = jnp.mean((jnp.argmax(logits, axis=-1) == lab).astype(jnp.float32))
        return loss, acc
    gl, ga = ce_acc(grapheme_logits, labels[:, 0])
    vl, va = ce_acc(vowel_logits, labels[:, 1])
    cl, ca = ce_acc(consonant_logits, labels[:, 2])
    return {
        'grapheme_loss': gl, 'grapheme_acc': ga,
        'vowel_loss': vl, 'vowel_acc': va,
        'consonant_loss': cl, 'consonant_acc': ca,
        'loss': gl + vl + cl, 'acc': (ga + va + ca) / 3.0,
    }


def _make_inputs(key, b, n_g, n_v, n_c):
    kg, kv, kc, k0, k1, k2 = jax.random.split(key, 6)
    grapheme_logits = jax.random.normal(kg, (b, n_g), dtype=jnp.float32)
    vowel_logits = jax.random.normal(kv, (b, n_v), dtype=jnp.float32)
    consonant_logits = jax.random.normal(kc, (b, n_c), dtype=jnp.float32)
    labels = jnp.stack([
        jax.random.randint(k0, (b,), 0, n_g),
        jax.random.randint(k1, (b,), 0, n_v),
        jax.random.randint(k2, (b,), 0, n_c),
    ], axis=1).astype(jnp.int32)                      # (b, 3)
    return grapheme_logits, vowel_logits, consonant_logits, labels


if __name__ == "__main__":
    N_GRAPHEME, N_VOWEL, N_CONSONANT = 168, 11, 7
    key = jax.random.PRNGKey(0)
    k_a, k_b = jax.random.split(key, 2)

    # Case 1: small batch, single block (grid of 1).
    g, v, c, lab = _make_inputs(k_a, 8, N_GRAPHEME, N_VOWEL, N_CONSONANT)
    result = multi_heads_evaluation_forward(g, v, c, lab)
    result = jax.tree_util.tree_map(jax.block_until_ready, result)
    ref = _reference_forward(g, v, c, lab)
    for name in ref:
        assert jnp.allclose(result[name], ref[name], rtol=1e-5, atol=1e-5), \
            (name, result[name], ref[name])

    # Case 2: batch-tiled grid with a partial (masked) last tile.
    g2, v2, c2, lab2 = _make_inputs(k_b, 20, N_GRAPHEME, N_VOWEL, N_CONSONANT)
    result2 = multi_heads_evaluation_forward(g2, v2, c2, lab2, block_rows=8)
    result2 = jax.tree_util.tree_map(jax.block_until_ready, result2)
    ref2 = _reference_forward(g2, v2, c2, lab2)
    for name in ref2:
        assert jnp.allclose(result2[name], ref2[name], rtol=1e-5, atol=1e-5), \
            (name, result2[name], ref2[name])

    print("KERNEL_OK")
</pallas_src>

<mosaic_0001>
module attributes {stable_mosaic.version = 11 : i64} {
  func.func @_fused_eval_kernel(%arg0: i32, %arg1: memref<8x168xf32, #tpu.memory_space<vmem>>, %arg2: memref<8x11xf32, #tpu.memory_space<vmem>>, %arg3: memref<8x7xf32, #tpu.memory_space<vmem>>, %arg4: memref<8x3xi32, #tpu.memory_space<vmem>>, %arg5: memref<1x128xf32, #tpu.memory_space<vmem>>) attributes {dimension_semantics = [#tpu.dimension_semantics<arbitrary>], iteration_bounds = array<i64: 1>, scalar_prefetch = 0 : i64, scratch_operands = 0 : i64, tpu.core_type = #tpu.core_type<tc>, window_params = [{transform_indices = @transform_0, window_bounds = array<i64: 8, 168>}, {transform_indices = @transform_1, window_bounds = array<i64: 8, 11>}, {transform_indices = @transform_2, window_bounds = array<i64: 8, 7>}, {transform_indices = @transform_3, window_bounds = array<i64: 8, 3>}, {pipeline_mode = #tpu.pipeline_mode<synchronous>, transform_indices = @transform_4, window_bounds = array<i64: 1, 128>}]} {
    %c0_i32 = arith.constant 0 : i32
    %0 = arith.cmpi eq, %arg0, %c0_i32 : i32
    %1 = arith.extui %0 : i1 to i32
    %c0_i32_0 = arith.constant 0 : i32
    %2 = arith.cmpi ne, %1, %c0_i32_0 : i32
    scf.if %2 {
      %cst_37 = arith.constant 0.000000e+00 : f32
      %152 = vector.broadcast %cst_37 : f32 to vector<1x128xf32>
      %c0_38 = arith.constant 0 : index
      %c0_39 = arith.constant 0 : index
      %153 = vector.load %arg5[%c0_38, %c0_39] : memref<1x128xf32, #tpu.memory_space<vmem>>, vector<1x128xf32>
      tpu.vector_store %arg5[%c0_38, %c0_39], %152 {strides = array<i32>} : memref<1x128xf32, #tpu.memory_space<vmem>>, vector<1x128xf32>,
    } else {
    }
    %c0 = arith.constant 0 : index
    %c0_1 = arith.constant 0 : index
    %3 = vector.load %arg4[%c0, %c0_1] : memref<8x3xi32, #tpu.memory_space<vmem>>, vector<8x3xi32>
    %c0_2 = arith.constant 0 : index
    %c0_3 = arith.constant 0 : index
    %4 = vector.load %arg1[%c0_2, %c0_3] : memref<8x168xf32, #tpu.memory_space<vmem>>, vector<8x168xf32>
    %5 = vector.extract_strided_slice %3 {offsets = [0, 0], sizes = [8, 1], strides = [1, 1]} : vector<8x3xi32> to vector<8x1xi32>
    %6 = tpu.iota {dimensions = array<i32: 1>} : vector<8x168xi32>
    %cst = arith.constant dense<0xFF800000> : vector<8xf32>
    %7 = vector.multi_reduction <maximumf>, %4, %cst [1] : vector<8x168xf32> to vector<8xf32>
    %8 = vector.shape_cast %7 : vector<8xf32> to vector<8x1xf32>
    %9 = vector.broadcast %8 : vector<8x1xf32> to vector<8x168xf32>
    %10 = arith.subf %4, %9 : vector<8x168xf32>
    %11 = math.exp %10 : vector<8x168xf32>
    %cst_4 = arith.constant dense<0.000000e+00> : vector<8xf32>
    %12 = vector.multi_reduction <add>, %11, %cst_4 [1] : vector<8x168xf32> to vector<8xf32>
    %13 = vector.shape_cast %12 : vector<8xf32> to vector<8x1xf32>
    %14 = math.log %13 : vector<8x1xf32>
    %15 = arith.addf %8, %14 : vector<8x1xf32>
    %16 = vector.broadcast %5 : vector<8x1xi32> to vector<8x168xi32>
    %17 = arith.cmpi eq, %6, %16 : vector<8x168xi32>
    %cst_5 = arith.constant 0.000000e+00 : f32
    %18 = vector.broadcast %cst_5 : f32 to vector<8x168xf32>
    %19 = arith.select %17, %4, %18 : vector<8x168xi1>, vector<8x168xf32>
    %cst_6 = arith.constant dense<0.000000e+00> : vector<8xf32>
    %20 = vector.multi_reduction <add>, %19, %cst_6 [1] : vector<8x168xf32> to vector<8xf32>
    %21 = vector.shape_cast %20 : vector<8xf32> to vector<8x1xf32>
    %22 = arith.subf %15, %21 : vector<8x1xf32>
    %23 = vector.broadcast %8 : vector<8x1xf32> to vector<8x168xf32>
    %24 = arith.cmpf oeq, %4, %23 : vector<8x168xf32>
    %c168_i32 = arith.constant 168 : i32
    %25 = vector.broadcast %c168_i32 : i32 to vector<8x168xi32>
    %26 = arith.select %24, %6, %25 : vector<8x168xi1>, vector<8x168xi32>
    %cst_7 = arith.constant dense<2147483647> : vector<8xi32>
    %27 = vector.multi_reduction <minsi>, %26, %cst_7 [1] : vector<8x168xi32> to vector<8xi32>
    %28 = vector.shape_cast %27 : vector<8xi32> to vector<8x1xi32>
    %29 = arith.cmpi eq, %28, %5 : vector<8x1xi32>
    %30 = arith.extui %29 : vector<8x1xi1> to vector<8x1xi32>
    %31 = arith.sitofp %30 : vector<8x1xi32> to vector<8x1xf32>
    %cst_8 = arith.constant dense<0.000000e+00> : vector<1xf32>
    %32 = vector.multi_reduction <add>, %22, %cst_8 [0] : vector<8x1xf32> to vector<1xf32>
    %33 = vector.shape_cast %32 : vector<1xf32> to vector<1x1xf32>
    %cst_9 = arith.constant dense<0.000000e+00> : vector<1xf32>
    %34 = vector.multi_reduction <add>, %31, %cst_9 [0] : vector<8x1xf32> to vector<1xf32>
    %35 = vector.shape_cast %34 : vector<1xf32> to vector<1x1xf32>
    %c0_10 = arith.constant 0 : index
    %c0_11 = arith.constant 0 : index
    %36 = vector.load %arg2[%c0_10, %c0_11] : memref<8x11xf32, #tpu.memory_space<vmem>>, vector<8x11xf32>
    %37 = vector.extract_strided_slice %3 {offsets = [0, 1], sizes = [8, 1], strides = [1, 1]} : vector<8x3xi32> to vector<8x1xi32>
    %38 = tpu.iota {dimensions = array<i32: 1>} : vector<8x11xi32>
    %cst_12 = arith.constant dense<0xFF800000> : vector<8xf32>
    %39 = vector.multi_reduction <maximumf>, %36, %cst_12 [1] : vector<8x11xf32> to vector<8xf32>
    %40 = vector.shape_cast %39 : vector<8xf32> to vector<8x1xf32>
    %41 = vector.broadcast %40 : vector<8x1xf32> to vector<8x11xf32>
    %42 = arith.subf %36, %41 : vector<8x11xf32>
    %43 = math.exp %42 : vector<8x11xf32>
    %cst_13 = arith.constant dense<0.000000e+00> : vector<8xf32>
    %44 = vector.multi_reduction <add>, %43, %cst_13 [1] : vector<8x11xf32> to vector<8xf32>
    %45 = vector.shape_cast %44 : vector<8xf32> to vector<8x1xf32>
    %46 = math.log %45 : vector<8x1xf32>
    %47 = arith.addf %40, %46 : vector<8x1xf32>
    %48 = vector.broadcast %37 : vector<8x1xi32> to vector<8x11xi32>
    %49 = arith.cmpi eq, %38, %48 : vector<8x11xi32>
    %cst_14 = arith.constant 0.000000e+00 : f32
    %50 = vector.broadcast %cst_14 : f32 to vector<8x11xf32>
    %51 = arith.select %49, %36, %50 : vector<8x11xi1>, vector<8x11xf32>
    %cst_15 = arith.constant dense<0.000000e+00> : vector<8xf32>
    %52 = vector.multi_reduction <add>, %51, %cst_15 [1] : vector<8x11xf32> to vector<8xf32>
    %53 = vector.shape_cast %52 : vector<8xf32> to vector<8x1xf32>
    %54 = arith.subf %47, %53 : vector<8x1xf32>
    %55 = vector.broadcast %40 : vector<8x1xf32> to vector<8x11xf32>
    %56 = arith.cmpf oeq, %36, %55 : vector<8x11xf32>
    %c11_i32 = arith.constant 11 : i32
    %57 = vector.broadcast %c11_i32 : i32 to vector<8x11xi32>
    %58 = arith.select %56, %38, %57 : vector<8x11xi1>, vector<8x11xi32>
    %cst_16 = arith.constant dense<2147483647> : vector<8xi32>
    %59 = vector.multi_reduction <minsi>, %58, %cst_16 [1] : vector<8x11xi32> to vector<8xi32>
    %60 = vector.shape_cast %59 : vector<8xi32> to vector<8x1xi32>
    %61 = arith.cmpi eq, %60, %37 : vector<8x1xi32>
    %62 = arith.extui %61 : vector<8x1xi1> to vector<8x1xi32>
    %63 = arith.sitofp %62 : vector<8x1xi32> to vector<8x1xf32>
    %cst_17 = arith.constant dense<0.000000e+00> : vector<1xf32>
    %64 = vector.multi_reduction <add>, %54, %cst_17 [0] : vector<8x1xf32> to vector<1xf32>
    %65 = vector.shape_cast %64 : vector<1xf32> to vector<1x1xf32>
    %cst_18 = arith.constant dense<0.000000e+00> : vector<1xf32>
    %66 = vector.multi_reduction <add>, %63, %cst_18 [0] : vector<8x1xf32> to vector<1xf32>
    %67 = vector.shape_cast %66 : vector<1xf32> to vector<1x1xf32>
    %c0_19 = arith.constant 0 : index
    %c0_20 = arith.constant 0 : index
    %68 = vector.load %arg3[%c0_19, %c0_20] : memref<8x7xf32, #tpu.memory_space<vmem>>, vector<8x7xf32>
    %69 = vector.extract_strided_slice %3 {offsets = [0, 2], sizes = [8, 1], strides = [1, 1]} : vector<8x3xi32> to vector<8x1xi32>
    %70 = tpu.iota {dimensions = array<i32: 1>} : vector<8x7xi32>
    %cst_21 = arith.constant dense<0xFF800000> : vector<8xf32>
    %71 = vector.multi_reduction <maximumf>, %68, %cst_21 [1] : vector<8x7xf32> to vector<8xf32>
    %72 = vector.shape_cast %71 : vector<8xf32> to vector<8x1xf32>
    %73 = vector.broadcast %72 : vector<8x1xf32> to vector<8x7xf32>
    %74 = arith.subf %68, %73 : vector<8x7xf32>
    %75 = math.exp %74 : vector<8x7xf32>
    %cst_22 = arith.constant dense<0.000000e+00> : vector<8xf32>
    %76 = vector.multi_reduction <add>, %75, %cst_22 [1] : vector<8x7xf32> to vector<8xf32>
    %77 = vector.shape_cast %76 : vector<8xf32> to vector<8x1xf32>
    %78 = math.log %77 : vector<8x1xf32>
    %79 = arith.addf %72, %78 : vector<8x1xf32>
    %80 = vector.broadcast %69 : vector<8x1xi32> to vector<8x7xi32>
    %81 = arith.cmpi eq, %70, %80 : vector<8x7xi32>
    %cst_23 = arith.constant 0.000000e+00 : f32
    %82 = vector.broadcast %cst_23 : f32 to vector<8x7xf32>
    %83 = arith.select %81, %68, %82 : vector<8x7xi1>, vector<8x7xf32>
    %cst_24 = arith.constant dense<0.000000e+00> : vector<8xf32>
    %84 = vector.multi_reduction <add>, %83, %cst_24 [1] : vector<8x7xf32> to vector<8xf32>
    %85 = vector.shape_cast %84 : vector<8xf32> to vector<8x1xf32>
    %86 = arith.subf %79, %85 : vector<8x1xf32>
    %87 = vector.broadcast %72 : vector<8x1xf32> to vector<8x7xf32>
    %88 = arith.cmpf oeq, %68, %87 : vector<8x7xf32>
    %c7_i32 = arith.constant 7 : i32
    %89 = vector.broadcast %c7_i32 : i32 to vector<8x7xi32>
    %90 = arith.select %88, %70, %89 : vector<8x7xi1>, vector<8x7xi32>
    %cst_25 = arith.constant dense<2147483647> : vector<8xi32>
    %91 = vector.multi_reduction <minsi>, %90, %cst_25 [1] : vector<8x7xi32> to vector<8xi32>
    %92 = vector.shape_cast %91 : vector<8xi32> to vector<8x1xi32>
    %93 = arith.cmpi eq, %92, %69 : vector<8x1xi32>
    %94 = arith.extui %93 : vector<8x1xi1> to vector<8x1xi32>
    %95 = arith.sitofp %94 : vector<8x1xi32> to vector<8x1xf32>
    %cst_26 = arith.constant dense<0.000000e+00> : vector<1xf32>
    %96 = vector.multi_reduction <add>, %86, %cst_26 [0] : vector<8x1xf32> to vector<1xf32>
    %97 = vector.shape_cast %96 : vector<1xf32> to vector<1x1xf32>
    %cst_27 = arith.constant dense<0.000000e+00> : vector<1xf32>
    %98 = vector.multi_reduction <add>, %95, %cst_27 [0] : vector<8x1xf32> to vector<1xf32>
    %99 = vector.shape_cast %98 : vector<1xf32> to vector<1x1xf32>
    %100 = tpu.iota {dimensions = array<i32: 1>} : vector<1x128xi32>
    %cst_28 = arith.constant 0.000000e+00 : f32
    %101 = vector.broadcast %cst_28 : f32 to vector<1x128xf32>
    %c0_i32_29 = arith.constant 0 : i32
    %102 = vector.broadcast %c0_i32_29 : i32 to vector<1x128xi32>
    %103 = arith.cmpi eq, %100, %102 : vector<1x128xi32>
    %104 = vector.shape_cast %33 : vector<1x1xf32> to vector<1x1xf32>
    %105 = vector.broadcast %104 : vector<1x1xf32> to vector<1x128xf32>
    %106 = arith.select %103, %105, %101 : vector<1x128xi1>, vector<1x128xf32>
    %c1_i32 = arith.constant 1 : i32
    %107 = vector.broadcast %c1_i32 : i32 to vector<1x128xi32>
    %108 = arith.cmpi eq, %100, %107 : vector<1x128xi32>
    %109 = vector.shape_cast %35 : vector<1x1xf32> to vector<1x1xf32>
    %110 = vector.broadcast %109 : vector<1x1xf32> to vector<1x128xf32>
    %111 = arith.select %108, %110, %106 : vector<1x128xi1>, vector<1x128xf32>
    %c2_i32 = arith.constant 2 : i32
    %112 = vector.broadcast %c2_i32 : i32 to vector<1x128xi32>
    %113 = arith.cmpi eq, %100, %112 : vector<1x128xi32>
    %114 = vector.shape_cast %65 : vector<1x1xf32> to vector<1x1xf32>
    %115 = vector.broadcast %114 : vector<1x1xf32> to vector<1x128xf32>
    %116 = arith.select %113, %115, %111 : vector<1x128xi1>, vector<1x128xf32>
    %c3_i32 = arith.constant 3 : i32
    %117 = vector.broadcast %c3_i32 : i32 to vector<1x128xi32>
    %118 = arith.cmpi eq, %100, %117 : vector<1x128xi32>
    %119 = vector.shape_cast %67 : vector<1x1xf32> to vector<1x1xf32>
    %120 = vector.broadcast %119 : vector<1x1xf32> to vector<1x128xf32>
    %121 = arith.select %118, %120, %116 : vector<1x128xi1>, vector<1x128xf32>
    %c4_i32 = arith.constant 4 : i32
    %122 = vector.broadcast %c4_i32 : i32 to vector<1x128xi32>
    %123 = arith.cmpi eq, %100, %122 : vector<1x128xi32>
    %124 = vector.shape_cast %97 : vector<1x1xf32> to vector<1x1xf32>
    %125 = vector.broadcast %124 : vector<1x1xf32> to vector<1x128xf32>
    %126 = arith.select %123, %125, %121 : vector<1x128xi1>, vector<1x128xf32>
    %c5_i32 = arith.constant 5 : i32
    %127 = vector.broadcast %c5_i32 : i32 to vector<1x128xi32>
    %128 = arith.cmpi eq, %100, %127 : vector<1x128xi32>
    %129 = vector.shape_cast %99 : vector<1x1xf32> to vector<1x1xf32>
    %130 = vector.broadcast %129 : vector<1x1xf32> to vector<1x128xf32>
    %131 = arith.select %128, %130, %126 : vector<1x128xi1>, vector<1x128xf32>
    %c6_i32 = arith.constant 6 : i32
    %132 = vector.broadcast %c6_i32 : i32 to vector<1x128xi32>
    %133 = arith.cmpi eq, %100, %132 : vector<1x128xi32>
    %134 = arith.addf %33, %65 : vector<1x1xf32>
    %135 = arith.addf %134, %97 : vector<1x1xf32>
    %136 = vector.shape_cast %135 : vector<1x1xf32> to vector<1x1xf32>
    %137 = vector.broadcast %136 : vector<1x1xf32> to vector<1x128xf32>
    %138 = arith.select %133, %137, %131 : vector<1x128xi1>, vector<1x128xf32>
    %c7_i32_30 = arith.constant 7 : i32
    %139 = vector.broadcast %c7_i32_30 : i32 to vector<1x128xi32>
    %140 = arith.cmpi eq, %100, %139 : vector<1x128xi32>
    %141 = arith.addf %35, %67 : vector<1x1xf32>
    %142 = arith.addf %141, %99 : vector<1x1xf32>
    %143 = vector.shape_cast %142 : vector<1x1xf32> to vector<1x1xf32>
    %144 = vector.broadcast %143 : vector<1x1xf32> to vector<1x128xf32>
    %145 = arith.select %140, %144, %138 : vector<1x128xi1>, vector<1x128xf32>
    %c0_31 = arith.constant 0 : index
    %c0_32 = arith.constant 0 : index
    %146 = vector.load %arg5[%c0_31, %c0_32] : memref<1x128xf32, #tpu.memory_space<vmem>>, vector<1x128xf32>
    %147 = arith.addf %146, %145 : vector<1x128xf32>
    %c0_33 = arith.constant 0 : index
    %c0_34 = arith.constant 0 : index
    %148 = vector.load %arg5[%c0_33, %c0_34] : memref<1x128xf32, #tpu.memory_space<vmem>>, vector<1x128xf32>
    tpu.vector_store %arg5[%c0_33, %c0_34], %147 {strides = array<i32>} : memref<1x128xf32, #tpu.memory_space<vmem>>, vector<1x128xf32>,
    %c0_i32_35 = arith.constant 0 : i32
    %149 = arith.cmpi eq, %arg0, %c0_i32_35 : i32
    %150 = arith.extui %149 : i1 to i32
    %c0_i32_36 = arith.constant 0 : i32
    %151 = arith.cmpi ne, %150, %c0_i32_36 : i32
    scf.if %151 {
      %c7_i32_37 = arith.constant 7 : i32
      %152 = vector.broadcast %c7_i32_37 : i32 to vector<1x128xi32>
      %153 = arith.cmpi eq, %100, %152 : vector<1x128xi32>
      %cst_38 = arith.constant 0.0416666679 : f32
      %cst_39 = arith.constant 1.250000e-01 : f32
      %154 = vector.broadcast %cst_38 : f32 to vector<1x128xf32>
      %155 = vector.broadcast %cst_39 : f32 to vector<1x128xf32>
      %156 = arith.select %153, %154, %155 : vector<1x128xi1>, vector<1x128xf32>
      %c0_40 = arith.constant 0 : index
      %c0_41 = arith.constant 0 : index
      %157 = vector.load %arg5[%c0_40, %c0_41] : memref<1x128xf32, #tpu.memory_space<vmem>>, vector<1x128xf32>
      %158 = arith.mulf %157, %156 : vector<1x128xf32>
      %c0_42 = arith.constant 0 : index
      %c0_43 = arith.constant 0 : index
      %159 = vector.load %arg5[%c0_42, %c0_43] : memref<1x128xf32, #tpu.memory_space<vmem>>, vector<1x128xf32>
      tpu.vector_store %arg5[%c0_42, %c0_43], %158 {strides = array<i32>} : memref<1x128xf32, #tpu.memory_space<vmem>>, vector<1x128xf32>,
    } else {
    }
    return
  }
  func.func @transform_0(%arg0: i32) -> (i32, i32) {
    %c0_i32 = arith.constant 0 : i32
    %c0_i32_0 = arith.constant 0 : i32
    return %arg0, %c0_i32 : i32, i32
  }
  func.func @transform_1(%arg0: i32) -> (i32, i32) {
    %c0_i32 = arith.constant 0 : i32
    %c0_i32_0 = arith.constant 0 : i32
    return %arg0, %c0_i32 : i32, i32
  }
  func.func @transform_2(%arg0: i32) -> (i32, i32) {
    %c0_i32 = arith.constant 0 : i32
    %c0_i32_0 = arith.constant 0 : i32
    return %arg0, %c0_i32 : i32, i32
  }
  func.func @transform_3(%arg0: i32) -> (i32, i32) {
    %c0_i32 = arith.constant 0 : i32
    %c0_i32_0 = arith.constant 0 : i32
    return %arg0, %c0_i32 : i32, i32
  }
  func.func @transform_4(%arg0: i32) -> (i32, i32) {
    %c0_i32 = arith.constant 0 : i32
    %c0_i32_0 = arith.constant 0 : i32
    %c0_i32_1 = arith.constant 0 : i32
    return %c0_i32, %c0_i32_0 : i32, i32
  }
}

</mosaic_0001>

<llo_original>
// kernel: multi_heads_evaluation_forward.1
$region0: #{multi_heads_evaluation_forward.1}
  #allocation0 [shape = 'u32[]', space=smem, size = 0x4, offset = 0x4, fixed_abs, tag = 'smem constant byte address 0x4 - core index']
  #allocation1 [shape = 'u32[144,128]{1,0:T(1,128)}', space=vmem, size = 0x12000, scoped, tag = 'internal scratch']
  %s0 = inlined_call_operand.hbm [shape: f32[8,168], index: 0, kind: input, shape index: {}]
  %s1 = inlined_call_operand.vmem [shape: f32[8,11], index: 1, kind: input, shape index: {}]
  %s2 = inlined_call_operand.vmem [shape: f32[8,7], index: 2, kind: input, shape index: {}]
  %s3 = inlined_call_operand.vmem [shape: s32[8,3], index: 3, kind: input, shape index: {}]
  %s4 = inlined_call_operand.vmem [shape: f32[1,128], index: 4, kind: output, shape index: {}]
  %s5 = sld [smem:[#allocation0]]
  $region38: #{multi_heads_evaluation_forward.1} parent=0
    _
  %s7 = ssub.s32 1, %s5
  %s8 = scalar_select 0, %s7, %s5
  $region1: #{multi_heads_evaluation_forward.1} parent=0
    #allocation2 [shape = 'u8[8192]{0}', space=vmem, size = 0x2000, scoped, tag = 'input window, operand 0, single buffered']
    #allocation3 [shape = 's32[1]{0}', space=sflag, size = 0x4, scoped, tag = 'scoped memory for multi_heads_evaluation_forward.1']
    %9 = vsyncpa [#allocation3], 0
    // Predicated region
    $region2: #{multi_heads_evaluation_forward.1} parent=1 // pred_check
      _
    $region3: #{multi_heads_evaluation_forward.1} parent=1 // pred_check_branch
      %11 = sbr.rel (0) target = $region5
    $region4: #{multi_heads_evaluation_forward.1} parent=1 // pred_region
      %s13 = ssub.s32 256, 256
      %14 = vsyncadd [#allocation3], %s13
      %s16 = sshll.u32 [#allocation2], 4
      %s17 = int_to_ptr.vmem [resolvable:$true] %s16
      %19 = dma.hbm_to_vmem [thread:$0]  %s0, 256, %s17, [#allocation3]
    $region5: #{multi_heads_evaluation_forward.1} parent=1 // pred_fallthru
      _
    // Predicated region
    $region6: #{multi_heads_evaluation_forward.1} parent=1 // pred_check
      _
    $region7: #{multi_heads_evaluation_forward.1} parent=1 // pred_check_branch
      %21 = sbr.rel (0) target = $region9
    $region8: #{multi_heads_evaluation_forward.1} parent=1 // pred_region
      _
    $region9: #{multi_heads_evaluation_forward.1} parent=1 // pred_fallthru
      _
    // Predicated region
    $region10: #{multi_heads_evaluation_forward.1} parent=1 // pred_check
      _
    $region11: #{multi_heads_evaluation_forward.1} parent=1 // pred_check_branch
      %23 = sbr.rel (0) target = $region13
    $region12: #{multi_heads_evaluation_forward.1} parent=1 // pred_region
      _
    $region13: #{multi_heads_evaluation_forward.1} parent=1 // pred_fallthru
      _
    // Predicated region
    $region14: #{multi_heads_evaluation_forward.1} parent=1 // pred_check
      _
    $region15: #{multi_heads_evaluation_forward.1} parent=1 // pred_check_branch
      %25 = sbr.rel (0) target = $region17
    $region16: #{multi_heads_evaluation_forward.1} parent=1 // pred_region
      _
    $region17: #{multi_heads_evaluation_forward.1} parent=1 // pred_fallthru
      _
    // Predicated region
    $region18: #{multi_heads_evaluation_forward.1} parent=1 // pred_check
      _
    $region19: #{multi_heads_evaluation_forward.1} parent=1 // pred_check_branch
      %27 = sbr.rel (0) target = $region21
    $region20: #{multi_heads_evaluation_forward.1} parent=1 // pred_region
      %28 = dma.done [#allocation3], 256
    $region21: #{multi_heads_evaluation_forward.1} parent=1 // pred_fallthru
      _
    %p29 = scmp.eq.s32.totalorder 0, 0
    // Predicated region
    $region22: #{multi_heads_evaluation_forward.1} parent=1 // pred_check
      %p30 = pneg %p29
    $region23: #{multi_heads_evaluation_forward.1} parent=1 // pred_check_branch
      %32 = sbr.rel (%p30) target = $region25
    $region24: #{multi_heads_evaluation_forward.1} parent=1 // pred_region
      %33 = vst [vmem:[%s4] sm:$0x1] 0.0
    $region25: #{multi_heads_evaluation_forward.1} parent=1 // pred_fallthru
      _
    %v34 = vld [vmem:[%s3] sm:$0xff]
    %v35 = vld [vmem:[#allocation2] sm:$0xff]
    %v36 = vld [vmem:[#allocation2 + $0x8] sm:$0xff]
    %v37 = vlaneseq
    %v38 = vand.u32 %v37, 127
    %v39 = vadd.s32 %v38, 128
    %vm40 = vcmask 326656
    %v41 = vsel %vm40, %v36, -inf
    %v42 = vmax.f32 %v35, %v41
    %43 = vmax.xlane.f32.xlu0 %v42
    %v44 = vpop.xlane.xlu0 %43
    %v45 = vsub.f32 %v35, %v44
    %v46 = vsub.f32 %v36, %v44
    %v47 = vmul.f32 %v45, 1.442695
    %v48 = vpow.pop %v47
    %v49 = vmul.f32 %v46, 1.442695
    %v50 = vpow.pop %v49
    %v51 = vsel %vm40, %v50, 0.0
    %v52 = vadd.f32 %v48, %v51
    %53 = vadd.xlane.f32.xlu0 %v52
    %v54 = vpop.xlane.xlu0 %53
    %v55 = vlog2.pop %v54
    %v56 = vmul.f32 %v55, 0.6931472
    %v57 = vadd.f32 %v44, %v56
    %58 = vset.pattern.permute.xlu0 0
    %59 = vperm.xlu0 %58, %v34
    %v60 = vpop.permute.xlu0 %59
    %vm61 = vcmp.eq.s32.totalorder %v38, %v60
    %vm62 = vcmp.eq.s32.totalorder %v39, %v60
    %v63 = vsel %vm61, %v35, 0.0
    %v64 = vsel %vm62, %v36, 0.0
    %v65 = vsel %vm40, %v64, 0.0
    %v66 = vadd.f32 %v63, %v65
    %67 = vadd.xlane.f32.xlu0 %v66
    %v68 = vpop.xlane.xlu0 %67
    %v69 = vsub.f32 %v57, %v68
    %vm70 = vcmp.eq.f32.partialorder %v35, %v44
    %vm71 = vcmp.eq.f32.partialorder %v36, %v44
    %v72 = vsel %vm70, %v38, 168
    %v73 = vsel %vm71, %v39, 168
    %v74 = vsel %vm40, %v73, 2147483647
    %vm75 = vcmp.lt.s32.totalorder %v72, %v74
    %v76 = vsel %vm75, %v72, %v74
    %v77 = vand.u32 %v76, 65535
    %v78 = vshra.s32 %v76, 16
    %v79 = vcvt.s32.f32 %v77
    %v80 = vcvt.s32.f32 %v78
    %81 = vmin.xlane.f32.xlu0 %v80
    %v82 = vpop.xlane.xlu0 %81
    %vm83 = vcmp.eq.f32.partialorder %v80, %v82
    %v84 = vsel %vm83, %v79, inf
    %85 = vmin.xlane.f32.xlu0 %v84
    %v86 = vpop.xlane.xlu0 %85
    %v87 = vcvt.f32.s32 %v86
    %v88 = vcvt.f32.s32 %v82
    %v89 = vshll.u32 %v88, 16
    %v90 = vadd.s32 %v89, %v87
    %vm91 = vcmp.eq.s32.totalorder %v90, %v34
    %v92 = vsel %vm91, 1, 0
    %v93 = vcvt.s32.f32 %v92
    %v94 = vrot.slane %v69, 4
    %v95 = vadd.f32 %v69, %v94
    %v96 = vrot.slane %v95, 2
    %v97 = vadd.f32 %v95, %v96
    %v98 = vrot.slane %v97, 1
    %v99 = vadd.f32 %v97, %v98
    %vm100 = vcmask 7168
    %v101 = vsel %vm100, %v93, 0.0
    %v102 = vrot.slane %v101, 4
    %v103 = vadd.f32 %v101, %v102
    %v104 = vrot.slane %v103, 2
    %v105 = vadd.f32 %v103, %v104
    %v106 = vrot.slane %v105, 1
    %v107 = vadd.f32 %v105, %v106
    %v108 = vld [vmem:[%s1] sm:$0xff]
    %vm109 = vcmask 89088
    %v110 = vsel %vm109, %v108, -inf
    %111 = vmax.xlane.f32.xlu0 %v110
    %v112 = vpop.xlane.xlu0 %111
    %v113 = vsub.f32 %v108, %v112
    %v114 = vmul.f32 %v113, 1.442695
    %v115 = vpow.pop %v114
    %v116 = vsel %vm109, %v115, 0.0
    %117 = vadd.xlane.f32.xlu0 %v116
    %v118 = vpop.xlane.xlu0 %117
    %v119 = vlog2.pop %v118
    %v120 = vmul.f32 %v119, 0.6931472
    %v121 = vadd.f32 %v112, %v120
    %122 = vset.pattern.permute.xlu0 1
    %123 = vperm.xlu0 %122, %v34
    %v124 = vpop.permute.xlu0 %123
    %vm125 = vcmp.eq.s32.totalorder %v38, %v124
    %v126 = vsel %vm125, %v108, 0.0
    %v127 = vsel %vm109, %v126, 0.0
    %128 = vadd.xlane.f32.xlu0 %v127
    %v129 = vpop.xlane.xlu0 %128
    %v130 = vsub.f32 %v121, %v129
    %vm131 = vcmp.eq.f32.partialorder %v108, %v112
    %v132 = vsel %vm131, %v38, 11
    %v133 = vsel %vm109, %v132, 2147483647
    %v134 = vand.u32 %v133, 65535
    %v135 = vshra.s32 %v133, 16
    %v136 = vcvt.s32.f32 %v134
    %v137 = vcvt.s32.f32 %v135
    %138 = vmin.xlane.f32.xlu0 %v137
    %v139 = vpop.xlane.xlu0 %138
    %vm140 = vcmp.eq.f32.partialorder %v137, %v139
    %v141 = vsel %vm140, %v136, inf
    %142 = vmin.xlane.f32.xlu0 %v141
    %v143 = vpop.xlane.xlu0 %142
    %v144 = vcvt.f32.s32 %v143
    %v145 = vcvt.f32.s32 %v139
    %v146 = vshll.u32 %v145, 16
    %v147 = vadd.s32 %v146, %v144
    %vm148 = vcmp.eq.s32.totalorder %v147, %v34
    %v149 = vsel %vm148, 1, 0
    %v150 = vcvt.s32.f32 %v149
    %v151 = vrot.slane %v130, 4
    %v152 = vadd.f32 %v130, %v151
    %v153 = vrot.slane %v152, 2
    %v154 = vadd.f32 %v152, %v153
    %v155 = vrot.slane %v154, 1
    %v156 = vadd.f32 %v154, %v155
    %vm157 = vcmask 15368
    %v158 = vsel %vm157, %v150, 0.0
    %v159 = vrot.slane %v158, 4
    %v160 = vadd.f32 %v158, %v159
    %v161 = vrot.slane %v160, 2
    %v162 = vadd.f32 %v160, %v161
    %v163 = vrot.slane %v162, 1
    %v164 = vadd.f32 %v162, %v163
    %v165 = vld [vmem:[%s2] sm:$0xff]
    %vm166 = vcmask 56320
    %v167 = vsel %vm166, %v165, -inf
    %168 = vmax.xlane.f32.xlu0 %v167
    %v169 = vpop.xlane.xlu0 %168
    %v170 = vsub.f32 %v165, %v169
    %v171 = vmul.f32 %v170, 1.442695
    %v172 = vpow.pop %v171
    %v173 = vsel %vm166, %v172, 0.0
    %174 = vadd.xlane.f32.xlu0 %v173
    %v175 = vpop.xlane.xlu0 %174
    %v176 = vlog2.pop %v175
    %v177 = vmul.f32 %v176, 0.6931472
    %v178 = vadd.f32 %v169, %v177
    %179 = vset.pattern.permute.xlu0 2
    %180 = vperm.xlu0 %179, %v34
    %v181 = vpop.permute.xlu0 %180
    %vm182 = vcmp.eq.s32.totalorder %v38, %v181
    %v183 = vsel %vm182, %v165, 0.0
    %v184 = vsel %vm166, %v183, 0.0
    %185 = vadd.xlane.f32.xlu0 %v184
    %v186 = vpop.xlane.xlu0 %185
    %v187 = vsub.f32 %v178, %v186
    %vm188 = vcmp.eq.f32.partialorder %v165, %v169
    %v189 = vsel %vm188, %v38, 7
    %v190 = vsel %vm166, %v189, 2147483647
    %v191 = vand.u32 %v190, 65535
    %v192 = vshra.s32 %v190, 16
    %v193 = vcvt.s32.f32 %v191
    %v194 = vcvt.s32.f32 %v192
    %195 = vmin.xlane.f32.xlu0 %v194
    %v196 = vpop.xlane.xlu0 %195
    %vm197 = vcmp.eq.f32.partialorder %v194, %v196
    %v198 = vsel %vm197, %v193, inf
    %199 = vmin.xlane.f32.xlu0 %v198
    %v200 = vpop.xlane.xlu0 %199
    %v201 = vcvt.f32.s32 %v200
    %v202 = vcvt.f32.s32 %v196
    %v203 = vshll.u32 %v202, 16
    %v204 = vadd.s32 %v203, %v201
    %vm205 = vcmp.eq.s32.totalorder %v204, %v34
    %v206 = vsel %vm205, 1, 0
    %v207 = vcvt.s32.f32 %v206
    %v208 = vrot.slane %v187, 4
    %v209 = vadd.f32 %v187, %v208
    %v210 = vrot.slane %v209, 2
    %v211 = vadd.f32 %v209, %v210
    %v212 = vrot.slane %v211, 1
    %v213 = vadd.f32 %v211, %v212
    %vm214 = vcmask 23568
    %v215 = vsel %vm214, %v207, 0.0
    %v216 = vrot.slane %v215, 4
    %v217 = vadd.f32 %v215, %v216
    %v218 = vrot.slane %v217, 2
    %v219 = vadd.f32 %v217, %v218
    %v220 = vrot.slane %v219, 1
    %v221 = vadd.f32 %v219, %v220
    %vm222 = vcmp.eq.s32.totalorder %v38, 0
    %v223 = vsel %vm222, %v99, 0.0
    %vm224 = vcmp.eq.s32.totalorder %v38, 1
    %226 = vset.pattern.permute.xlu0 0
    %227 = vperm.xlu0 %226, %v107
    %v228 = vpop.permute.xlu0 %227
    %v230 = vsel %vm224, %v228, %v223
    %vm231 = vcmp.eq.s32.totalorder %v38, 2
    %v232 = vsel %vm231, %v156, %v230
    %vm233 = vcmp.eq.s32.totalorder %v38, 3
    %235 = vset.pattern.permute.xlu0 1
    %236 = vperm.xlu0 %235, %v164
    %v237 = vpop.permute.xlu0 %236
    %v239 = vsel %vm233, %v237, %v232
    %vm240 = vcmp.eq.s32.totalorder %v38, 4
    %v241 = vsel %vm240, %v213, %v239
    %vm242 = vcmp.eq.s32.totalorder %v38, 5
    %244 = vset.pattern.permute.xlu0 2
    %245 = vperm.xlu0 %244, %v221
    %v246 = vpop.permute.xlu0 %245
    %v248 = vsel %vm242, %v246, %v241
    %vm249 = vcmp.eq.s32.totalorder %v38, 6
    %v250 = vadd.f32 %v99, %v156
    %v251 = vadd.f32 %v250, %v213
    %v252 = vsel %vm249, %v251, %v248
    %vm253 = vcmp.eq.s32.totalorder %v38, 7
    %254 = vrot.lane.b32.xlu0 %v164, 127
    %v255 = vpop.permute.xlu0 %254
    %v257 = vadd.f32 %v107, %v255
    %258 = vrot.lane.b32.xlu0 %v221, 126
    %v259 = vpop.permute.xlu0 %258
    %v261 = vadd.f32 %v257, %v259
    %263 = vset.pattern.permute.xlu0 0
    %264 = vperm.xlu0 %263, %v261
    %v265 = vpop.permute.xlu0 %264
    %v267 = vsel %vm253, %v265, %v252
    %v268 = vld [vmem:[%s4] sm:$0x1]
    %v269 = vadd.f32 %v268, %v267
    %270 = vst [vmem:[%s4] sm:$0x1] %v269
    // Predicated region
    $region26: #{multi_heads_evaluation_forward.1} parent=1 // pred_check
      %p271 = pneg %p29
    $region27: #{multi_heads_evaluation_forward.1} parent=1 // pred_check_branch
      %273 = sbr.rel (%p271) target = $region29
    $region28: #{multi_heads_evaluation_forward.1} parent=1 // pred_region
      %v274 = vsel %vm253, 0.041666668, 0.125
      %v275 = vld [vmem:[%s4] sm:$0x1]
      %v276 = vmul.f32 %v275, %v274
      %277 = vst [vmem:[%s4] sm:$0x1] %v276
    $region29: #{multi_heads_evaluation_forward.1} parent=1 // pred_fallthru
      _
    // Predicated region
    $region30: #{multi_heads_evaluation_forward.1} parent=1 // pred_check
      _
    $region31: #{multi_heads_evaluation_forward.1} parent=1 // pred_check_branch
      %279 = sbr.rel (0) target = $region33
    $region32: #{multi_heads_evaluation_forward.1} parent=1 // pred_region
      _
    $region33: #{multi_heads_evaluation_forward.1} parent=1 // pred_fallthru
      _
    // Predicated region
    $region34: #{multi_heads_evaluation_forward.1} parent=1 // pred_check
      _
    $region35: #{multi_heads_evaluation_forward.1} parent=1 // pred_check_branch
      %281 = sbr.rel (0) target = $region37
    $region36: #{multi_heads_evaluation_forward.1} parent=1 // pred_region
      _
    $region37: #{multi_heads_evaluation_forward.1} parent=1 // pred_fallthru
      _
    %282 = vsyncpa [#allocation3], 1

</llo_original>
